<compile_context>
chip_gen: v5e
topology: v5e:2x2
jax: 0.10.0
libtpu: 0.0.40
codegen_flags: <defaults>
</compile_context>

<pallas_src>
import jax
import jax.numpy as jnp
from jax.experimental import pallas as pl
from jax.experimental.pallas import tpu as pltpu

LEAKY_SLOPE = 0.01   # nn.LeakyReLU default
BN_EPS = 1e-5        # nn.BatchNorm1d default
LANE = 128


def _round_up(n, m):
    return ((n + m - 1) // m) * m


def _make_kernel(num_hidden_layers: int, negative_slope: float):
    """Fused all-events MLP kernel (statically unrolled over hidden layers)."""
    L = num_hidden_layers

    def kernel(*refs):
        x_ref, w1_ref, bias_ref = refs[0], refs[1], refs[2]
        if L > 1:
            wh_ref = refs[3]
            wo_ref, bo_ref, out_ref = refs[4], refs[5], refs[6]
        else:
            wh_ref = None
            wo_ref, bo_ref, out_ref = refs[3], refs[4], refs[5]

        wdt = w1_ref.dtype   # MXU operand dtype (bf16 in the fast path)

        # First hidden layer (weights concatenated along the output dim).
        h = jnp.dot(x_ref[...].astype(wdt), w1_ref[...],
                    preferred_element_type=jnp.float32)          # (TB, E*H) f32
        h = h + bias_ref[0:1, :]
        h = jnp.maximum(h, negative_slope * h)                   # LeakyReLU

        # Deeper hidden layers (block-diagonal keeps events independent).
        for l in range(1, L):
            h = jnp.dot(h.astype(wdt), wh_ref[l - 1],
                        preferred_element_type=jnp.float32)
            h = h + bias_ref[l:l + 1, :]
            h = jnp.maximum(h, negative_slope * h)

        # Output head (block-diagonal, zero-padded to a lane-dense width).
        y = jnp.dot(h.astype(wdt), wo_ref[...],
                    preferred_element_type=jnp.float32)          # (TB, out_pad)
        y = y + bo_ref[...]
        out_ref[...] = y.astype(out_ref.dtype)                   # lane-dense store

    return kernel


def _block_diag(w):
    """(E, d_in, d_out) -> (E*d_in, E*d_out) block-diagonal."""
    E, di, do = w.shape
    eye = jnp.eye(E, dtype=w.dtype)
    return jnp.einsum("eij,ef->eifj", w, eye).reshape(E * di, E * do)


def pack_params(params, weight_dtype=jnp.bfloat16):
    """Fold per-event params (and eval-mode BN) into the fused kernel layout."""
    Ws, bs, ss, ts = params["W"], params["b"], params["s"], params["t"]
    Wo, bo = params["Wo"], params["bo"]
    E, H, out_features = Wo.shape
    L = len(Ws)
    D = E * H
    eo = E * out_features
    out_pad = pl.cdiv(eo, LANE) * LANE   # no-op slice when eo % 128 == 0

    # --- Fold BN(scale s, shift t) of layer l into layer l+1 (pack time, f32) ---
    #   (a*s + t) @ W + b  ==  a @ (diag(s) W) + (t @ W + b)
    Wf, bf = [Ws[0]], [bs[0]]
    for l in range(1, L):
        s_prev, t_prev = ss[l - 1], ts[l - 1]               # (E, 1, H)
        Wf.append(jnp.swapaxes(s_prev, 1, 2) * Ws[l])       # diag(s) @ W
        bf.append(bs[l] + jnp.matmul(t_prev, Ws[l]))        # t @ W + b
    s_last, t_last = ss[L - 1], ts[L - 1]
    Wo_f = jnp.swapaxes(s_last, 1, 2) * Wo
    bo_f = bo + jnp.matmul(t_last, Wo)

    # First hidden layer: concatenate per-event weights along the output dim.
    F_in = Wf[0].shape[1]
    W1 = jnp.transpose(Wf[0], (1, 0, 2)).reshape(F_in, D).astype(weight_dtype)

    # Remaining hidden layers: block-diagonal so events never mix.
    Wh = None
    if L > 1:
        Wh = jnp.stack([_block_diag(Wf[l]) for l in range(1, L)],
                       axis=0).astype(weight_dtype)          # (L-1, D, D)

    # Per-layer biases (BN already folded) as one (L, D) f32 slab.
    bias = jnp.stack([bf[l].reshape(D) for l in range(L)], axis=0)

    # Output head: block-diagonal, zero-padded to a lane-dense width.
    Wo_bd = _block_diag(Wo_f)                                # (D, E*out)
    Wo_p = (jnp.zeros((D, out_pad), jnp.float32)
            .at[:, :eo].set(Wo_bd).astype(weight_dtype))
    bo_p = jnp.zeros((1, out_pad), jnp.float32).at[0, :eo].set(bo_f.reshape(eo))

    return {
        "W1": W1, "bias": bias, "Wh": Wh, "Wo": Wo_p, "bo": bo_p,
        "num_events": E, "out_features": out_features, "out_pad": out_pad,
        "num_hidden_layers": L,
    }


def cause_specific_net_forward(x, packed, batch_tile=256):
    """x: (B, in_features). Returns (B, num_events, out_features)."""
    B, F_in = x.shape
    E = packed["num_events"]
    out_f = packed["out_features"]
    out_pad = packed["out_pad"]
    L = packed["num_hidden_layers"]
    D = packed["W1"].shape[1]

    # Batch tile: multiple of 8 sublanes (>=16 preferred for bf16 packing).
    TB = min(batch_tile, _round_up(B, 8))
    B_pad = _round_up(B, TB)
    xp = x if B_pad == B else jnp.pad(x, ((0, B_pad - B), (0, 0)))

    kernel = _make_kernel(L, LEAKY_SLOPE)

    operands = [xp, packed["W1"], packed["bias"]]
    in_specs = [
        pl.BlockSpec((TB, F_in), lambda i: (i, 0)),           # batch-tiled input
        pl.BlockSpec((F_in, D), lambda i: (0, 0)),            # resident weights
        pl.BlockSpec((L, D), lambda i: (0, 0)),
    ]
    if L > 1:
        operands.append(packed["Wh"])
        in_specs.append(pl.BlockSpec((L - 1, D, D), lambda i: (0, 0, 0)))
    operands += [packed["Wo"], packed["bo"]]
    in_specs += [
        pl.BlockSpec((D, out_pad), lambda i: (0, 0)),
        pl.BlockSpec((1, out_pad), lambda i: (0, 0)),
    ]
    out_specs = pl.BlockSpec((TB, out_pad), lambda i: (i, 0))

    out_itemsize = jnp.dtype(x.dtype).itemsize
    flops = 2 * B_pad * (F_in * D + (L - 1) * D * D + D * out_pad)
    weight_bytes = sum(int(op.size) * op.dtype.itemsize for op in operands[1:])
    io_bytes = int(xp.size) * xp.dtype.itemsize + B_pad * out_pad * out_itemsize
    tile_bytes = TB * F_in * xp.dtype.itemsize + TB * out_pad * out_itemsize
    vmem_limit = int(min(100 << 20,
                         max(16 << 20, weight_bytes + 4 * tile_bytes + (4 << 20))))

    out = pl.pallas_call(
        kernel,
        out_shape=jax.ShapeDtypeStruct((B_pad, out_pad), x.dtype),
        grid=(B_pad // TB,),
        in_specs=in_specs,
        out_specs=out_specs,
        compiler_params=pltpu.CompilerParams(
            dimension_semantics=("parallel",),     # shard batch tiles across TCs (v7x)
            vmem_limit_bytes=vmem_limit),
        cost_estimate=pl.CostEstimate(flops=flops, transcendentals=0,
                                      bytes_accessed=int(weight_bytes + io_bytes)),
    )(*operands)

    # Lane-dense padded slab -> (B, E, out); contiguous reshape, no transpose.
    return out[:B, :E * out_f].reshape(B, E, out_f)


def init_params(key, in_features, intermediate_size, num_hidden_layers,
                out_features, num_events):
    """Deterministic synthetic per-event parameters (eval-mode BN as scale/shift)."""
    dims = [in_features] + [intermediate_size] * num_hidden_layers
    Ws, bs, ss, ts = [], [], [], []
    for l in range(num_hidden_layers):
        d_in, d_out = dims[l], dims[l + 1]
        key, k_w, k_b, k_g, k_be, k_m, k_v = jax.random.split(key, 7)
        W = jax.random.normal(k_w, (num_events, d_in, d_out), jnp.float32) * 0.1
        b = jax.random.normal(k_b, (num_events, 1, d_out), jnp.float32) * 0.1
        gamma = 1.0 + 0.1 * jax.random.normal(k_g, (num_events, 1, d_out), jnp.float32)
        beta = 0.1 * jax.random.normal(k_be, (num_events, 1, d_out), jnp.float32)
        running_mean = 0.1 * jax.random.normal(k_m, (num_events, 1, d_out), jnp.float32)
        running_var = jnp.abs(
            1.0 + 0.1 * jax.random.normal(k_v, (num_events, 1, d_out), jnp.float32))
        scale = gamma / jnp.sqrt(running_var + BN_EPS)   # folded BN (eval mode)
        shift = beta - running_mean * scale
        Ws.append(W); bs.append(b); ss.append(scale); ts.append(shift)
    key, k_wo, k_bo = jax.random.split(key, 3)
    Wo = jax.random.normal(k_wo, (num_events, intermediate_size, out_features),
                           jnp.float32) * 0.1
    bo = jax.random.normal(k_bo, (num_events, 1, out_features), jnp.float32) * 0.1
    return {"W": Ws, "b": bs, "s": ss, "t": ts, "Wo": Wo, "bo": bo}


def reference_forward(x, params):
    """Pure-JAX per-event reference (mirrors the PyTorch forward, eval mode)."""
    E = params["Wo"].shape[0]
    outs = []
    for e in range(E):
        h = x
        for l in range(len(params["W"])):
            h = h @ params["W"][l][e] + params["b"][l][e]
            h = jnp.where(h >= 0, h, LEAKY_SLOPE * h)
            h = h * params["s"][l][e] + params["t"][l][e]
        outs.append(h @ params["Wo"][e] + params["bo"][e])
    return jnp.stack(outs, axis=1)


if __name__ == "__main__":
    batch = 8
    in_features = 32
    intermediate_size = 32
    num_hidden_layers = 2
    out_features = 16
    num_events = 2

    key = jax.random.PRNGKey(0)
    key, kx = jax.random.split(key)
    x = jax.random.normal(kx, (batch, in_features), jnp.float32)
    params = init_params(key, in_features, intermediate_size,
                         num_hidden_layers, out_features, num_events)

    ref = reference_forward(x, params)

    # (a) Exact-math validation: f32 weights, BN folded into next layer.
    packed_f32 = pack_params(params, weight_dtype=jnp.float32)
    out_f32 = jax.block_until_ready(cause_specific_net_forward(x, packed_f32))
    assert out_f32.shape == (batch, num_events, out_features), out_f32.shape
    assert jnp.allclose(out_f32, ref, atol=1e-4, rtol=1e-4), "f32 mismatch vs reference"

    # (b) Performance configuration: bf16 MXU operands, f32 accumulate/elementwise.
    packed = pack_params(params)   # default weight_dtype=bf16
    out = jax.block_until_ready(cause_specific_net_forward(x, packed))
    assert out.shape == (batch, num_events, out_features), out.shape
    assert jnp.allclose(out, ref, atol=1e-2, rtol=1e-2), "bf16 mismatch vs reference"

    print("KERNEL_OK")
</pallas_src>

<mosaic_0001>
module attributes {stable_mosaic.version = 11 : i64} {
  func.func @kernel(%arg0: i32, %arg1: memref<8x32xf32, #tpu.memory_space<vmem>>, %arg2: memref<32x64xf32, #tpu.memory_space<vmem>>, %arg3: memref<2x64xf32, #tpu.memory_space<vmem>>, %arg4: memref<1x64x64xf32, #tpu.memory_space<vmem>>, %arg5: memref<64x128xf32, #tpu.memory_space<vmem>>, %arg6: memref<1x128xf32, #tpu.memory_space<vmem>>, %arg7: memref<8x128xf32, #tpu.memory_space<vmem>>) attributes {dimension_semantics = [#tpu.dimension_semantics<parallel>], iteration_bounds = array<i64: 1>, scalar_prefetch = 0 : i64, scratch_operands = 0 : i64, tpu.core_type = #tpu.core_type<tc>, window_params = [{transform_indices = @transform_0, window_bounds = array<i64: 8, 32>}, {pipeline_mode = #tpu.pipeline_mode<synchronous>, transform_indices = @transform_1, window_bounds = array<i64: 32, 64>}, {pipeline_mode = #tpu.pipeline_mode<synchronous>, transform_indices = @transform_2, window_bounds = array<i64: 2, 64>}, {pipeline_mode = #tpu.pipeline_mode<synchronous>, transform_indices = @transform_3, window_bounds = array<i64: 1, 64, 64>}, {pipeline_mode = #tpu.pipeline_mode<synchronous>, transform_indices = @transform_4, window_bounds = array<i64: 64, 128>}, {pipeline_mode = #tpu.pipeline_mode<synchronous>, transform_indices = @transform_5, window_bounds = array<i64: 1, 128>}, {transform_indices = @transform_6, window_bounds = array<i64: 8, 128>}]} {
    %c0 = arith.constant 0 : index
    %c0_0 = arith.constant 0 : index
    %0 = vector.load %arg1[%c0, %c0_0] : memref<8x32xf32, #tpu.memory_space<vmem>>, vector<8x32xf32>
    %c0_1 = arith.constant 0 : index
    %c0_2 = arith.constant 0 : index
    %1 = vector.load %arg2[%c0_1, %c0_2] : memref<32x64xf32, #tpu.memory_space<vmem>>, vector<32x64xf32>
    %cst = arith.constant dense<0.000000e+00> : vector<8x64xf32>
    %2 = tpu.matmul %0, %1, %cst {dimension_numbers = #tpu.dot_dimension_numbers<[1], [0], [0], [1], [0, 0, 1, 1], [], []>} : vector<8x32xf32>, vector<32x64xf32>, vector<8x64xf32> -> vector<8x64xf32>
    %c0_3 = arith.constant 0 : index
    %c0_4 = arith.constant 0 : index
    %3 = vector.load %arg3[%c0_3, %c0_4] : memref<2x64xf32, #tpu.memory_space<vmem>>, vector<1x64xf32>
    %4 = vector.broadcast %3 : vector<1x64xf32> to vector<8x64xf32>
    %5 = arith.addf %2, %4 : vector<8x64xf32>
    %cst_5 = arith.constant 0.00999999977 : f32
    %6 = vector.broadcast %cst_5 : f32 to vector<8x64xf32>
    %7 = arith.mulf %6, %5 : vector<8x64xf32>
    %8 = arith.maximumf %5, %7 : vector<8x64xf32>
    %c0_6 = arith.constant 0 : index
    %c0_7 = arith.constant 0 : index
    %c0_8 = arith.constant 0 : index
    %9 = vector.load %arg4[%c0_6, %c0_7, %c0_8] : memref<1x64x64xf32, #tpu.memory_space<vmem>>, vector<1x64x64xf32>
    %10 = vector.shape_cast %9 : vector<1x64x64xf32> to vector<64x64xf32>
    %cst_9 = arith.constant dense<0.000000e+00> : vector<8x64xf32>
    %11 = tpu.matmul %8, %10, %cst_9 {dimension_numbers = #tpu.dot_dimension_numbers<[1], [0], [0], [1], [0, 0, 1, 1], [], []>} : vector<8x64xf32>, vector<64x64xf32>, vector<8x64xf32> -> vector<8x64xf32>
    %c1 = arith.constant 1 : index
    %c0_10 = arith.constant 0 : index
    %12 = vector.load %arg3[%c1, %c0_10] : memref<2x64xf32, #tpu.memory_space<vmem>>, vector<1x64xf32>
    %13 = vector.broadcast %12 : vector<1x64xf32> to vector<8x64xf32>
    %14 = arith.addf %11, %13 : vector<8x64xf32>
    %cst_11 = arith.constant 0.00999999977 : f32
    %15 = vector.broadcast %cst_11 : f32 to vector<8x64xf32>
    %16 = arith.mulf %15, %14 : vector<8x64xf32>
    %17 = arith.maximumf %14, %16 : vector<8x64xf32>
    %c0_12 = arith.constant 0 : index
    %c0_13 = arith.constant 0 : index
    %18 = vector.load %arg5[%c0_12, %c0_13] : memref<64x128xf32, #tpu.memory_space<vmem>>, vector<64x128xf32>
    %cst_14 = arith.constant dense<0.000000e+00> : vector<8x128xf32>
    %19 = tpu.matmul %17, %18, %cst_14 {dimension_numbers = #tpu.dot_dimension_numbers<[1], [0], [0], [1], [0, 0, 1, 1], [], []>} : vector<8x64xf32>, vector<64x128xf32>, vector<8x128xf32> -> vector<8x128xf32>
    %c0_15 = arith.constant 0 : index
    %c0_16 = arith.constant 0 : index
    %20 = vector.load %arg6[%c0_15, %c0_16] : memref<1x128xf32, #tpu.memory_space<vmem>>, vector<1x128xf32>
    %21 = vector.broadcast %20 : vector<1x128xf32> to vector<8x128xf32>
    %22 = arith.addf %19, %21 : vector<8x128xf32>
    %c0_17 = arith.constant 0 : index
    %c0_18 = arith.constant 0 : index
    %23 = vector.load %arg7[%c0_17, %c0_18] : memref<8x128xf32, #tpu.memory_space<vmem>>, vector<8x128xf32>
    tpu.vector_store %arg7[%c0_17, %c0_18], %22 {strides = array<i32>} : memref<8x128xf32, #tpu.memory_space<vmem>>, vector<8x128xf32>,
    return
  }
  func.func @transform_0(%arg0: i32) -> (i32, i32) {
    %c0_i32 = arith.constant 0 : i32
    %c0_i32_0 = arith.constant 0 : i32
    return %arg0, %c0_i32 : i32, i32
  }
  func.func @transform_1(%arg0: i32) -> (i32, i32) {
    %c0_i32 = arith.constant 0 : i32
    %c0_i32_0 = arith.constant 0 : i32
    %c0_i32_1 = arith.constant 0 : i32
    return %c0_i32, %c0_i32_0 : i32, i32
  }
  func.func @transform_2(%arg0: i32) -> (i32, i32) {
    %c0_i32 = arith.constant 0 : i32
    %c0_i32_0 = arith.constant 0 : i32
    %c0_i32_1 = arith.constant 0 : i32
    return %c0_i32, %c0_i32_0 : i32, i32
  }
  func.func @transform_3(%arg0: i32) -> (i32, i32, i32) {
    %c0_i32 = arith.constant 0 : i32
    %c0_i32_0 = arith.constant 0 : i32
    %c0_i32_1 = arith.constant 0 : i32
    %c0_i32_2 = arith.constant 0 : i32
    return %c0_i32, %c0_i32_0, %c0_i32_1 : i32, i32, i32
  }
  func.func @transform_4(%arg0: i32) -> (i32, i32) {
    %c0_i32 = arith.constant 0 : i32
    %c0_i32_0 = arith.constant 0 : i32
    %c0_i32_1 = arith.constant 0 : i32
    return %c0_i32, %c0_i32_0 : i32, i32
  }
  func.func @transform_5(%arg0: i32) -> (i32, i32) {
    %c0_i32 = arith.constant 0 : i32
    %c0_i32_0 = arith.constant 0 : i32
    %c0_i32_1 = arith.constant 0 : i32
    return %c0_i32, %c0_i32_0 : i32, i32
  }
  func.func @transform_6(%arg0: i32) -> (i32, i32) {
    %c0_i32 = arith.constant 0 : i32
    %c0_i32_0 = arith.constant 0 : i32
    return %arg0, %c0_i32 : i32, i32
  }
}

</mosaic_0001>

<llo_original>
// kernel: tpu_custom_call.1
$region0: #{tpu_custom_call.1}
  #allocation0 [shape = 'u32[]', space=smem, size = 0x4, offset = 0x4, fixed_abs, tag = 'smem constant byte address 0x4 - core index']
  #allocation1 [shape = 'u32[72,128]{1,0:T(1,128)}', space=vmem, size = 0x9000, scoped, tag = 'internal scratch']
  %s0 = inlined_call_operand.hbm [shape: f32[8,32], index: 0, kind: input, shape index: {}]
  %s1 = inlined_call_operand.hbm [shape: f32[32,64], index: 1, kind: input, shape index: {}]
  %s2 = inlined_call_operand.hbm [shape: f32[2,64], index: 2, kind: input, shape index: {}]
  %s3 = inlined_call_operand.hbm [shape: f32[1,64,64], index: 3, kind: input, shape index: {}]
  %s4 = inlined_call_operand.hbm [shape: f32[64,128], index: 4, kind: input, shape index: {}]
  %s5 = inlined_call_operand.vmem [shape: f32[1,128], index: 5, kind: input, shape index: {}]
  %s6 = inlined_call_operand.hbm [shape: f32[8,128], index: 6, kind: output, shape index: {}]
  %s7 = sld [smem:[#allocation0]]
  $region54: #{tpu_custom_call.1} parent=0
    _
  %s9 = ssub.s32 1, %s7
  %s10 = scalar_select 0, %s9, %s7
  $region1: #{tpu_custom_call.1} parent=0
    #allocation2 [shape = 'u8[4096]{0}', space=vmem, size = 0x1000, scoped, tag = 'input window, operand 0, single buffered']
    #allocation3 [shape = 's32[1]{0}', space=sflag, size = 0x4, scoped, tag = 'scoped memory for tpu_custom_call.1']
    #allocation4 [shape = 's32[1]{0}', space=sflag, size = 0x4, scoped, tag = 'scoped memory for tpu_custom_call.1']
    #allocation5 [shape = 'u8[16384]{0}', space=vmem, size = 0x4000, scoped, tag = 'input window, operand 1, single buffered']
    #allocation6 [shape = 's32[1]{0}', space=sflag, size = 0x4, scoped, tag = 'scoped memory for tpu_custom_call.1']
    #allocation7 [shape = 'u8[1024]{0}', space=vmem, size = 0x400, scoped, tag = 'input window, operand 2, single buffered']
    #allocation8 [shape = 'u8[32768]{0}', space=vmem, size = 0x8000, scoped, tag = 'input window, operand 3, single buffered']
    #allocation9 [shape = 's32[1]{0}', space=sflag, size = 0x4, scoped, tag = 'scoped memory for tpu_custom_call.1']
    #allocation10 [shape = 'u8[32768]{0}', space=vmem, size = 0x8000, scoped, tag = 'input window, operand 4, single buffered']
    #allocation11 [shape = 'u8[4096]{0}', space=vmem, size = 0x1000, scoped, tag = 'output window, operand 0, single buffered']
    %11 = vsyncpa [#allocation3], 0
    %12 = vsyncpa [#allocation6], 0
    %13 = vsyncpa [#allocation9], 0
    %14 = vsyncpa [#allocation4], 0
    // Predicated region
    $region2: #{tpu_custom_call.1} parent=1 // pred_check
      _
    $region3: #{tpu_custom_call.1} parent=1 // pred_check_branch
      %16 = sbr.rel (0) target = $region5
    $region4: #{tpu_custom_call.1} parent=1 // pred_region
      %18 = vsyncadd [#allocation3], 0
      %s20 = sshll.u32 %s0, 4
      %s21 = int_to_ptr.hbm [resolvable:$true] %s20
      %s22 = sshll.u32 [#allocation2], 4
      %s23 = int_to_ptr.vmem [resolvable:$true] %s22
      %25 = dma.hbm_to_vmem [thread:$0]  %s21, 128, %s23, [#allocation3]
    $region5: #{tpu_custom_call.1} parent=1 // pred_fallthru
      _
    // Predicated region
    $region6: #{tpu_custom_call.1} parent=1 // pred_check
      _
    $region7: #{tpu_custom_call.1} parent=1 // pred_check_branch
      %27 = sbr.rel (0) target = $region9
    $region8: #{tpu_custom_call.1} parent=1 // pred_region
      %29 = vsyncadd [#allocation6], 0
      %s30 = sshll.u32 %s1, 4
      %s31 = int_to_ptr.hbm [resolvable:$true] %s30
      %s32 = sshll.u32 [#allocation5], 4
      %s33 = int_to_ptr.vmem [resolvable:$true] %s32
      %38 = dma.hbm_to_vmem [thread:$0]  %s31, 512, %s33, [#allocation6], 128, 128, 8
    $region9: #{tpu_custom_call.1} parent=1 // pred_fallthru
      _
    // Predicated region
    $region10: #{tpu_custom_call.1} parent=1 // pred_check
      _
    $region11: #{tpu_custom_call.1} parent=1 // pred_check_branch
      %40 = sbr.rel (0) target = $region13
    $region12: #{tpu_custom_call.1} parent=1 // pred_region
      %42 = vsyncadd [#allocation6], 0
      %s44 = sshll.u32 %s2, 4
      %s45 = int_to_ptr.hbm [resolvable:$true] %s44
      %s46 = sshll.u32 [#allocation7], 4
      %s47 = int_to_ptr.vmem [resolvable:$true] %s46
      %49 = dma.hbm_to_vmem [thread:$0]  %s45, 32, %s47, [#allocation6]
    $region13: #{tpu_custom_call.1} parent=1 // pred_fallthru
      _
    // Predicated region
    $region14: #{tpu_custom_call.1} parent=1 // pred_check
      _
    $region15: #{tpu_custom_call.1} parent=1 // pred_check_branch
      %51 = sbr.rel (0) target = $region17
    $region16: #{tpu_custom_call.1} parent=1 // pred_region
      %53 = vsyncadd [#allocation9], 0
      %s54 = sshll.u32 %s3, 4
      %s55 = int_to_ptr.hbm [resolvable:$true] %s54
      %s56 = sshll.u32 [#allocation8], 4
      %s57 = int_to_ptr.vmem [resolvable:$true] %s56
      %62 = dma.hbm_to_vmem [thread:$0]  %s55, 1024, %s57, [#allocation9], 128, 128, 8
    $region17: #{tpu_custom_call.1} parent=1 // pred_fallthru
      _
    // Predicated region
    $region18: #{tpu_custom_call.1} parent=1 // pred_check
      _
    $region19: #{tpu_custom_call.1} parent=1 // pred_check_branch
      %64 = sbr.rel (0) target = $region21
    $region20: #{tpu_custom_call.1} parent=1 // pred_region
      %66 = vsyncadd [#allocation9], 0
      %s67 = sshll.u32 %s4, 4
      %s68 = int_to_ptr.hbm [resolvable:$true] %s67
      %s69 = sshll.u32 [#allocation10], 4
      %s70 = int_to_ptr.vmem [resolvable:$true] %s69
      %75 = dma.hbm_to_vmem [thread:$0]  %s68, 1024, %s70, [#allocation9], 128, 128, 8
    $region21: #{tpu_custom_call.1} parent=1 // pred_fallthru
      _
    // Predicated region
    $region22: #{tpu_custom_call.1} parent=1 // pred_check
      _
    $region23: #{tpu_custom_call.1} parent=1 // pred_check_branch
      %77 = sbr.rel (0) target = $region25
    $region24: #{tpu_custom_call.1} parent=1 // pred_region
      _
    $region25: #{tpu_custom_call.1} parent=1 // pred_fallthru
      _
    // Predicated region
    $region26: #{tpu_custom_call.1} parent=1 // pred_check
      _
    $region27: #{tpu_custom_call.1} parent=1 // pred_check_branch
      %79 = sbr.rel (0) target = $region29
    $region28: #{tpu_custom_call.1} parent=1 // pred_region
      %81 = dma.done [#allocation3], 128
    $region29: #{tpu_custom_call.1} parent=1 // pred_fallthru
      _
    // Predicated region
    $region30: #{tpu_custom_call.1} parent=1 // pred_check
      _
    $region31: #{tpu_custom_call.1} parent=1 // pred_check_branch
      %83 = sbr.rel (0) target = $region33
    $region32: #{tpu_custom_call.1} parent=1 // pred_region
      %85 = dma.done [#allocation6], 512
    $region33: #{tpu_custom_call.1} parent=1 // pred_fallthru
      _
    // Predicated region
    $region34: #{tpu_custom_call.1} parent=1 // pred_check
      _
    $region35: #{tpu_custom_call.1} parent=1 // pred_check_branch
      %87 = sbr.rel (0) target = $region37
    $region36: #{tpu_custom_call.1} parent=1 // pred_region
      %89 = dma.done [#allocation6], 32
    $region37: #{tpu_custom_call.1} parent=1 // pred_fallthru
      _
    // Predicated region
    $region38: #{tpu_custom_call.1} parent=1 // pred_check
      _
    $region39: #{tpu_custom_call.1} parent=1 // pred_check_branch
      %91 = sbr.rel (0) target = $region41
    $region40: #{tpu_custom_call.1} parent=1 // pred_region
      %93 = dma.done [#allocation9], 1024
    $region41: #{tpu_custom_call.1} parent=1 // pred_fallthru
      _
    // Predicated region
    $region42: #{tpu_custom_call.1} parent=1 // pred_check
      _
    $region43: #{tpu_custom_call.1} parent=1 // pred_check_branch
      %95 = sbr.rel (0) target = $region45
    $region44: #{tpu_custom_call.1} parent=1 // pred_region
      %97 = dma.done [#allocation9], 1024
    $region45: #{tpu_custom_call.1} parent=1 // pred_fallthru
      _
    %v98 = vld [vmem:[#allocation2] sm:$0xff]
    %v99 = vld [vmem:[#allocation5] sm:$0xff]
    %v100 = vld [vmem:[#allocation5 + $0x8] sm:$0xff]
    %v101 = vld [vmem:[#allocation5 + $0x10] sm:$0xff]
    %v102 = vld [vmem:[#allocation5 + $0x18] sm:$0xff]
    %v103 = vld [vmem:[#allocation7] sm:$0x1]
    %v104 = vperm.slane %v103, 0
    %vm105 = vcmask 261120
    %v107 = vsel %vm105, %v98, 0
    %109 = vmatpush.msra.mxu0 0.0
    %110 = vmatpush.msra.mxu0 0.0
    %111 = vmatpush.msra.mxu0 0.0
    %112 = vmatpush.msra.mxu0 0.0
    %113 = vmatpush.msra.mxu0 0.0
    %114 = vmatpush.msra.mxu0 0.0
    %115 = vmatpush.msra.mxu0 0.0
    %116 = vmatpush.msra.mxu0 0.0
    %117 = vmatpush.msra.mxu0 0.0
    %118 = vmatpush.msra.mxu0 0.0
    %119 = vmatpush.msra.mxu0 0.0
    %120 = vmatpush.msra.mxu0 0.0
    %121 = vmatpush.msra.mxu0 %v102
    %122 = vmatpush.msra.mxu0 %v101
    %123 = vmatpush.msra.mxu0 %v100
    %124 = vmatpush.msra.mxu0 %v99
    %125 = vmatmul.f32.gmra.mxu0 %v107
    %v126 = vpop.f32.mrf.mxu0
    %v127 = vadd.f32 %v104, %v126
    %128 = vdwg.mxu0
    %v129 = vmul.f32 %v127, 0.01
    %v130 = vmax.f32 %v127, %v129
    %v131 = vld [vmem:[#allocation8] sm:$0xff]
    %v132 = vld [vmem:[#allocation8 + $0x8] sm:$0xff]
    %v133 = vld [vmem:[#allocation8 + $0x10] sm:$0xff]
    %v134 = vld [vmem:[#allocation8 + $0x18] sm:$0xff]
    %v135 = vld [vmem:[#allocation8 + $0x20] sm:$0xff]
    %v136 = vld [vmem:[#allocation8 + $0x28] sm:$0xff]
    %v137 = vld [vmem:[#allocation8 + $0x30] sm:$0xff]
    %v138 = vld [vmem:[#allocation8 + $0x38] sm:$0xff]
    %v139 = vld [vmem:[#allocation7 + $0x1] sm:$0x1]
    %v140 = vperm.slane %v139, 0
    %vm141 = vcmask 523264
    %v143 = vsel %vm141, %v130, 0
    %145 = vmatpush.msra.mxu0 0.0
    %146 = vmatpush.msra.mxu0 0.0
    %147 = vmatpush.msra.mxu0 0.0
    %148 = vmatpush.msra.mxu0 0.0
    %149 = vmatpush.msra.mxu0 0.0
    %150 = vmatpush.msra.mxu0 0.0
    %151 = vmatpush.msra.mxu0 0.0
    %152 = vmatpush.msra.mxu0 0.0
    %153 = vmatpush.msra.mxu0 %v138
    %154 = vmatpush.msra.mxu0 %v137
    %155 = vmatpush.msra.mxu0 %v136
    %156 = vmatpush.msra.mxu0 %v135
    %157 = vmatpush.msra.mxu0 %v134
    %158 = vmatpush.msra.mxu0 %v133
    %159 = vmatpush.msra.mxu0 %v132
    %160 = vmatpush.msra.mxu0 %v131
    %161 = vmatmul.f32.gmra.mxu0 %v143
    %v162 = vpop.f32.mrf.mxu0
    %v163 = vadd.f32 %v140, %v162
    %164 = vdwg.mxu0
    %v165 = vmul.f32 %v163, 0.01
    %v166 = vmax.f32 %v163, %v165
    %v167 = vld [vmem:[#allocation10] sm:$0xff]
    %v168 = vld [vmem:[#allocation10 + $0x8] sm:$0xff]
    %v169 = vld [vmem:[#allocation10 + $0x10] sm:$0xff]
    %v170 = vld [vmem:[#allocation10 + $0x18] sm:$0xff]
    %v171 = vld [vmem:[#allocation10 + $0x20] sm:$0xff]
    %v172 = vld [vmem:[#allocation10 + $0x28] sm:$0xff]
    %v173 = vld [vmem:[#allocation10 + $0x30] sm:$0xff]
    %v174 = vld [vmem:[#allocation10 + $0x38] sm:$0xff]
    %v175 = vld [vmem:[%s5] sm:$0x1]
    %v177 = vperm.slane %v175, 0
    %v180 = vsel %vm141, %v166, 0
    %182 = vmatpush.msra.mxu0 0.0
    %183 = vmatpush.msra.mxu0 0.0
    %184 = vmatpush.msra.mxu0 0.0
    %185 = vmatpush.msra.mxu0 0.0
    %186 = vmatpush.msra.mxu0 0.0
    %187 = vmatpush.msra.mxu0 0.0
    %188 = vmatpush.msra.mxu0 0.0
    %189 = vmatpush.msra.mxu0 0.0
    %190 = vmatpush.msra.mxu0 %v174
    %191 = vmatpush.msra.mxu0 %v173
    %192 = vmatpush.msra.mxu0 %v172
    %193 = vmatpush.msra.mxu0 %v171
    %194 = vmatpush.msra.mxu0 %v170
    %195 = vmatpush.msra.mxu0 %v169
    %196 = vmatpush.msra.mxu0 %v168
    %197 = vmatpush.msra.mxu0 %v167
    %198 = vmatmul.f32.gmra.mxu0 %v180
    %v199 = vpop.f32.mrf.mxu0
    %v200 = vadd.f32 %v177, %v199
    %201 = vdwg.mxu0
    %202 = vst [vmem:[#allocation11] sm:$0xff] %v200
    // Predicated region
    $region46: #{tpu_custom_call.1} parent=1 // pred_check
      _
    $region47: #{tpu_custom_call.1} parent=1 // pred_check_branch
      %204 = sbr.rel (0) target = $region49
    $region48: #{tpu_custom_call.1} parent=1 // pred_region
      %206 = vsyncadd [#allocation4], 0
      %s208 = sshll.u32 [#allocation11], 4
      %s209 = int_to_ptr.vmem [resolvable:$true] %s208
      %s210 = sshll.u32 %s6, 4
      %s211 = int_to_ptr.hbm [resolvable:$true] %s210
      %213 = dma.vmem_to_hbm [thread:$0]  %s209, 128, %s211, [#allocation4]
    $region49: #{tpu_custom_call.1} parent=1 // pred_fallthru
      _
    // Predicated region
    $region50: #{tpu_custom_call.1} parent=1 // pred_check
      _
    $region51: #{tpu_custom_call.1} parent=1 // pred_check_branch
      %215 = sbr.rel (0) target = $region53
    $region52: #{tpu_custom_call.1} parent=1 // pred_region
      %217 = dma.done [#allocation4], 128
    $region53: #{tpu_custom_call.1} parent=1 // pred_fallthru
      _
    %218 = vsyncpa [#allocation3], 1
    %219 = vsyncpa [#allocation6], 1
    %220 = vsyncpa [#allocation9], 1
    %221 = vsyncpa [#allocation4], 1

</llo_original>
